<compile_context>
chip_gen: v6e
topology: v6e:2x2x1
jax: 0.10.0
libtpu: 0.0.40
codegen_flags: <defaults>
</compile_context>

<pallas_src>
import jax
import jax.numpy as jnp
from jax.experimental import pallas as pl
from jax.experimental.pallas import tpu as pltpu


def _round_up(x: int, m: int) -> int:
    return pl.cdiv(x, m) * m


def _pad2(x, rows: int, cols: int):
    return jnp.pad(x, ((0, rows - x.shape[0]), (0, cols - x.shape[1])))


def edge_mlp_kernel(x_ref, w1_ref, b1_ref, w2_ref, b2_ref, o_ref):
    # Layer 1: single fused matmul (== concat([s, r, e], 1) @ W1).
    # bf16 x bf16 -> f32 accumulate on the MXU.
    h = jnp.dot(x_ref[...], w1_ref[...], preferred_element_type=jnp.float32)
    h = h + b1_ref[...]                          # f32 bias add (sublane broadcast)
    # sigmoid(x) = 1 / (1 + exp(-x)); exp and the approx reciprocal both run on
    # the EUP slot instead of a VPU divide (v5e has the weakest VPU).
    h = pl.reciprocal(1.0 + jnp.exp(-h), approx=True)
    o = jnp.dot(h.astype(jnp.bfloat16), w2_ref[...],
                preferred_element_type=jnp.float32)
    o = o + b2_ref[...]
    o_ref[...] = o.astype(o_ref.dtype)           # lane-dense bf16 store


def edge_mlp_pallas(x, w1, b1, w2, b2, *, block_m=2048):
    """x: (n_edge, K) f32 fused features [senders | receivers | edges]."""
    n_edge, k = x.shape
    k_p, h_p = w1.shape
    n_p = w2.shape[1]

    # Rows: pad only to the bf16 sublane quantum (16). The grid uses cdiv, so a
    # partial tail block is masked by Pallas (garbage rows are row-independent
    # and sliced off by the caller) — no padding up to a block_m multiple.
    n_edge_p = _round_up(n_edge, 16)
    block_m = min(block_m, n_edge_p)
    grid = (pl.cdiv(n_edge_p, block_m),)

    # Single pad+cast pass: under jit the gather/concat/pad/convert collapse
    # into one XLA fusion emitting a single lane-dense bf16 activation buffer.
    x_p = _pad2(x, n_edge_p, k_p).astype(jnp.bfloat16)

    # Advisory cost model so XLA schedules neighbouring ops around this call.
    flops = 2 * n_edge_p * k_p * h_p + 2 * n_edge_p * h_p * n_p
    bytes_accessed = (x_p.size * 2                         # bf16 activations
                      + (w1.size + w2.size) * 2            # bf16 weights
                      + (b1.size + b2.size) * 4            # f32 biases
                      + n_edge_p * n_p * 2)                # bf16 output
    cost = pl.CostEstimate(flops=flops,
                           transcendentals=n_edge_p * h_p,
                           bytes_accessed=bytes_accessed)

    # VMEM budget: double-buffered activation/output tiles, double-buffered
    # (constant-index) weight/bias blocks, f32 hidden + accumulator temporaries.
    tile_bytes = (2 * block_m * k_p * 2              # x tile, 2 bufs, bf16
                  + 2 * block_m * n_p * 2            # out tile, 2 bufs, bf16
                  + 2 * (w1.size + w2.size) * 2      # weights, default 2 bufs
                  + 2 * (b1.size + b2.size) * 4      # biases, default 2 bufs
                  + block_m * h_p * 4                # f32 hidden intermediate
                  + block_m * n_p * 4)               # f32 acc before bf16 cast
    # Always set the scoped-VMEM limit explicitly (v5e default is only 16 MiB);
    # clamp to 48 MiB so it fits v7x's 64 MiB/TC with headroom for compiler scratch.
    vmem_limit = int(min(max(tile_bytes * 1.3, 32 * 1024 * 1024),
                         48 * 1024 * 1024))

    out_p = pl.pallas_call(
        edge_mlp_kernel,
        out_shape=jax.ShapeDtypeStruct((n_edge_p, n_p), jnp.bfloat16),
        grid=grid,
        in_specs=[
            pl.BlockSpec((block_m, k_p), lambda i: (i, 0)),   # fused activations
            pl.BlockSpec((k_p, h_p), lambda i: (0, 0)),       # W1 (resident)
            pl.BlockSpec((1, h_p), lambda i: (0, 0)),         # b1
            pl.BlockSpec((h_p, n_p), lambda i: (0, 0)),       # W2 (resident)
            pl.BlockSpec((1, n_p), lambda i: (0, 0)),         # b2
        ],
        out_specs=pl.BlockSpec((block_m, n_p), lambda i: (i, 0)),
        # TODO(synk): on v7x, verify 'parallel' genuinely shards the row axis
        # across both TensorCores; otherwise switch to pltpu.CORE_PARALLEL or
        # pl.core_map over create_tensorcore_mesh with per-core row halves.
        compiler_params=pltpu.CompilerParams(
            dimension_semantics=("parallel",),
            vmem_limit_bytes=vmem_limit),
        cost_estimate=cost,
    )(x_p, w1, b1, w2, b2)
    return out_p  # (n_edge_p, n_p) bf16; caller slices/casts (fused under jit)


class EdgeTransformer:
    """JAX/Pallas equivalent of the PyTorch Edge_Transformer module (sigmoid)."""

    def __init__(self, d_node: int, d_edge: int, d_edge_out: int, key,
                 block_m: int = 2048):
        d = 2 * d_node + d_edge
        d_hidden = 2 * d
        k1, k2, k3, k4 = jax.random.split(key, 4)
        bound1 = 1.0 / float(d) ** 0.5
        bound2 = 1.0 / float(d_hidden) ** 0.5
        # Stored pre-transposed [in, out]; values synthetic, shapes match nn.Linear.
        w1 = jax.random.uniform(k1, (d, d_hidden), jnp.float32, -bound1, bound1)
        b1 = jax.random.uniform(k2, (1, d_hidden), jnp.float32, -bound1, bound1)
        w2 = jax.random.uniform(k3, (d_hidden, d_edge_out), jnp.float32, -bound2, bound2)
        b2 = jax.random.uniform(k4, (1, d_edge_out), jnp.float32, -bound2, bound2)

        # Keep f32 originals for the reference path.
        self.w1_f32, self.b1_f32, self.w2_f32, self.b2_f32 = w1, b1, w2, b2

        # Lane-dense padded sizes. Activation K and output N round to 128
        # (memory-dominated); hidden prefers 256-multiples once it exceeds 128
        # (v6e/v7x MXU is 256x256; weight/compute-only cost).
        k_p = _round_up(d, 128)
        d_hidden_p = 128 if _round_up(d_hidden, 128) <= 128 else _round_up(d_hidden, 256)
        d_out_p = _round_up(d_edge_out, 128)

        # Fused W1 (rows ordered [senders | receivers | edges]); pad + bf16 ONCE.
        self.w1 = _pad2(w1, k_p, d_hidden_p).astype(jnp.bfloat16)
        self.b1 = _pad2(b1, 1, d_hidden_p)                        # f32
        # Padded hidden rows of W2 are zero => padded hidden lanes contribute 0
        # (sigmoid(0) = 0.5 in padded lanes * 0 = 0), so padding is a no-op.
        self.w2 = _pad2(w2, d_hidden_p, d_out_p).astype(jnp.bfloat16)
        self.b2 = _pad2(b2, 1, d_out_p)                           # f32

        self.d_node, self.d_edge, self.d_edge_out = d_node, d_edge, d_edge_out
        self.block_m = block_m

    def __call__(self, nodes, edges, senders, receivers):
        n_node = nodes.shape[0]
        n_edge = edges.shape[0]
        nodes = nodes.reshape(n_node, -1)
        edges = edges.reshape(n_edge, -1)
        # Graph gather + concat stay in plain JAX; with the fused single-K layout
        # they (plus pad/cast) collapse into one XLA fusion producing ONE
        # lane-dense bf16 buffer — no more 3x128-lane re-materialization.
        # TODO(synk): move the senders/receivers gather fully in-kernel (indices
        # in SMEM/VMEM + node table resident in VMEM) once a supported dynamic
        # row-gather lowering is available; a one-hot-matmul gather only wins
        # for small node tables.
        x = jnp.concatenate([nodes[senders], nodes[receivers], edges], axis=1)
        out_p = edge_mlp_pallas(x, self.w1, self.b1, self.w2, self.b2,
                                block_m=self.block_m)
        # Slice off padded rows/lanes; cast back to the module's f32 dtype.
        # Under jit this fuses with the consumer instead of a full extra copy.
        return out_p[:n_edge, :self.d_edge_out].astype(jnp.float32)


def reference_forward(model, nodes, edges, senders, receivers):
    """Pure f32 reference of the module semantics."""
    nodes = nodes.reshape(nodes.shape[0], -1)
    edges = edges.reshape(edges.shape[0], -1)
    x = jnp.concatenate([nodes[senders], nodes[receivers], edges], axis=1)
    h = jax.nn.sigmoid(x @ model.w1_f32 + model.b1_f32)
    return h @ model.w2_f32 + model.b2_f32


if __name__ == "__main__":
    key = jax.random.PRNGKey(0)
    k_nodes, k_edges, k_send, k_recv, k_params = jax.random.split(key, 5)

    # Small, module-consistent shapes.
    n_node, n_edge = 16, 8
    d_node, d_edge, d_edge_out = 8, 4, 8

    nodes = jax.random.normal(k_nodes, (n_node, d_node), jnp.float32)
    edges = jax.random.normal(k_edges, (n_edge, d_edge), jnp.float32)
    senders = jax.random.randint(k_send, (n_edge,), 0, n_node, jnp.int32)
    receivers = jax.random.randint(k_recv, (n_edge,), 0, n_node, jnp.int32)

    model = EdgeTransformer(d_node, d_edge, d_edge_out, k_params)

    fwd = jax.jit(model.__call__)
    new_edges = jax.block_until_ready(fwd(nodes, edges, senders, receivers))

    ref = reference_forward(model, nodes, edges, senders, receivers)
    assert new_edges.shape == (n_edge, d_edge_out)
    # Tolerance accounts for bf16 matmul operands / bf16 kernel output and the
    # approx (EUP) reciprocal in the kernel path.
    assert jnp.allclose(new_edges, ref, atol=5e-2, rtol=5e-2)

    print("KERNEL_OK")
</pallas_src>

<mosaic_0001>
module attributes {stable_mosaic.version = 11 : i64} {
  func.func @edge_mlp_kernel(%arg0: i32, %arg1: memref<16x128xbf16, #tpu.memory_space<vmem>>, %arg2: memref<128x128xbf16, #tpu.memory_space<vmem>>, %arg3: memref<1x128xf32, #tpu.memory_space<vmem>>, %arg4: memref<128x128xbf16, #tpu.memory_space<vmem>>, %arg5: memref<1x128xf32, #tpu.memory_space<vmem>>, %arg6: memref<16x128xbf16, #tpu.memory_space<vmem>>) attributes {dimension_semantics = [#tpu.dimension_semantics<parallel>], iteration_bounds = array<i64: 1>, scalar_prefetch = 0 : i64, scratch_operands = 0 : i64, tpu.core_type = #tpu.core_type<tc>, window_params = [{transform_indices = @transform_0, window_bounds = array<i64: 16, 128>}, {pipeline_mode = #tpu.pipeline_mode<synchronous>, transform_indices = @transform_1, window_bounds = array<i64: 128, 128>}, {pipeline_mode = #tpu.pipeline_mode<synchronous>, transform_indices = @transform_2, window_bounds = array<i64: 1, 128>}, {pipeline_mode = #tpu.pipeline_mode<synchronous>, transform_indices = @transform_3, window_bounds = array<i64: 128, 128>}, {pipeline_mode = #tpu.pipeline_mode<synchronous>, transform_indices = @transform_4, window_bounds = array<i64: 1, 128>}, {transform_indices = @transform_5, window_bounds = array<i64: 16, 128>}]} {
    %c0 = arith.constant 0 : index
    %c0_0 = arith.constant 0 : index
    %0 = vector.load %arg1[%c0, %c0_0] : memref<16x128xbf16, #tpu.memory_space<vmem>>, vector<16x128xbf16>
    %c0_1 = arith.constant 0 : index
    %c0_2 = arith.constant 0 : index
    %1 = vector.load %arg2[%c0_1, %c0_2] : memref<128x128xbf16, #tpu.memory_space<vmem>>, vector<128x128xbf16>
    %cst = arith.constant dense<0.000000e+00> : vector<16x128xf32>
    %2 = tpu.matmul %0, %1, %cst {dimension_numbers = #tpu.dot_dimension_numbers<[1], [0], [0], [1], [0, 0, 1, 1], [], []>} : vector<16x128xbf16>, vector<128x128xbf16>, vector<16x128xf32> -> vector<16x128xf32>
    %c0_3 = arith.constant 0 : index
    %c0_4 = arith.constant 0 : index
    %3 = vector.load %arg3[%c0_3, %c0_4] : memref<1x128xf32, #tpu.memory_space<vmem>>, vector<1x128xf32>
    %4 = vector.broadcast %3 : vector<1x128xf32> to vector<16x128xf32>
    %5 = arith.addf %2, %4 : vector<16x128xf32>
    %cst_5 = arith.constant 0.000000e+00 : f32
    %6 = vector.broadcast %cst_5 : f32 to vector<16x128xf32>
    %7 = arith.subf %6, %5 : vector<16x128xf32>
    %8 = math.exp %7 : vector<16x128xf32>
    %cst_6 = arith.constant 1.000000e+00 : f32
    %9 = vector.broadcast %cst_6 : f32 to vector<16x128xf32>
    %10 = arith.addf %9, %8 : vector<16x128xf32>
    %11 = tpu.reciprocal %10 {approx = true} : vector<16x128xf32> -> vector<16x128xf32>
    %12 = arith.truncf %11 : vector<16x128xf32> to vector<16x128xbf16>
    %c0_7 = arith.constant 0 : index
    %c0_8 = arith.constant 0 : index
    %13 = vector.load %arg4[%c0_7, %c0_8] : memref<128x128xbf16, #tpu.memory_space<vmem>>, vector<128x128xbf16>
    %cst_9 = arith.constant dense<0.000000e+00> : vector<16x128xf32>
    %14 = tpu.matmul %12, %13, %cst_9 {dimension_numbers = #tpu.dot_dimension_numbers<[1], [0], [0], [1], [0, 0, 1, 1], [], []>} : vector<16x128xbf16>, vector<128x128xbf16>, vector<16x128xf32> -> vector<16x128xf32>
    %c0_10 = arith.constant 0 : index
    %c0_11 = arith.constant 0 : index
    %15 = vector.load %arg5[%c0_10, %c0_11] : memref<1x128xf32, #tpu.memory_space<vmem>>, vector<1x128xf32>
    %16 = vector.broadcast %15 : vector<1x128xf32> to vector<16x128xf32>
    %17 = arith.addf %14, %16 : vector<16x128xf32>
    %18 = arith.truncf %17 : vector<16x128xf32> to vector<16x128xbf16>
    %c0_12 = arith.constant 0 : index
    %c0_13 = arith.constant 0 : index
    %19 = vector.load %arg6[%c0_12, %c0_13] : memref<16x128xbf16, #tpu.memory_space<vmem>>, vector<16x128xbf16>
    tpu.vector_store %arg6[%c0_12, %c0_13], %18 {strides = array<i32>} : memref<16x128xbf16, #tpu.memory_space<vmem>>, vector<16x128xbf16>,
    return
  }
  func.func @transform_0(%arg0: i32) -> (i32, i32) {
    %c0_i32 = arith.constant 0 : i32
    %c0_i32_0 = arith.constant 0 : i32
    return %arg0, %c0_i32 : i32, i32
  }
  func.func @transform_1(%arg0: i32) -> (i32, i32) {
    %c0_i32 = arith.constant 0 : i32
    %c0_i32_0 = arith.constant 0 : i32
    %c0_i32_1 = arith.constant 0 : i32
    return %c0_i32, %c0_i32_0 : i32, i32
  }
  func.func @transform_2(%arg0: i32) -> (i32, i32) {
    %c0_i32 = arith.constant 0 : i32
    %c0_i32_0 = arith.constant 0 : i32
    %c0_i32_1 = arith.constant 0 : i32
    return %c0_i32, %c0_i32_0 : i32, i32
  }
  func.func @transform_3(%arg0: i32) -> (i32, i32) {
    %c0_i32 = arith.constant 0 : i32
    %c0_i32_0 = arith.constant 0 : i32
    %c0_i32_1 = arith.constant 0 : i32
    return %c0_i32, %c0_i32_0 : i32, i32
  }
  func.func @transform_4(%arg0: i32) -> (i32, i32) {
    %c0_i32 = arith.constant 0 : i32
    %c0_i32_0 = arith.constant 0 : i32
    %c0_i32_1 = arith.constant 0 : i32
    return %c0_i32, %c0_i32_0 : i32, i32
  }
  func.func @transform_5(%arg0: i32) -> (i32, i32) {
    %c0_i32 = arith.constant 0 : i32
    %c0_i32_0 = arith.constant 0 : i32
    return %arg0, %c0_i32 : i32, i32
  }
}

</mosaic_0001>

<llo_original>
// kernel: a_call__.1
$region0: #{a_call__.1}
  #allocation0 [shape = 'u32[]', space=smem, size = 0x4, offset = 0x4, fixed_abs, tag = 'smem constant byte address 0x4 - core index']
  #allocation1 [shape = 'u32[144,128]{1,0:T(1,128)}', space=vmem, size = 0x12000, scoped, tag = 'internal scratch']
  %s0 = inlined_call_operand.vmem [shape: bf16[16,128], index: 0, kind: input, shape index: {}]
  %s1 = inlined_call_operand.vmem [shape: bf16[128,128], index: 1, kind: input, shape index: {}]
  %s2 = inlined_call_operand.vmem [shape: f32[1,128], index: 2, kind: input, shape index: {}]
  %s3 = inlined_call_operand.vmem [shape: bf16[128,128], index: 3, kind: input, shape index: {}]
  %s4 = inlined_call_operand.vmem [shape: f32[1,128], index: 4, kind: input, shape index: {}]
  %s5 = inlined_call_operand.vmem [shape: bf16[16,128], index: 5, kind: output, shape index: {}]
  %s6 = sld [smem:[#allocation0]]
  $region30: #{a_call__.1} parent=0
    _
  %s8 = ssub.s32 1, %s6
  %s9 = scalar_select 0, %s8, %s6
  // Predicated region
  $region2: #{a_call__.1} parent=0 // pred_check
    _
  $region3: #{a_call__.1} parent=0 // pred_check_branch
    %11 = sbr.rel (0) target = $region5
  $region4: #{a_call__.1} parent=0 // pred_region
    _
  $region5: #{a_call__.1} parent=0 // pred_fallthru
    _
  // Predicated region
  $region6: #{a_call__.1} parent=0 // pred_check
    _
  $region7: #{a_call__.1} parent=0 // pred_check_branch
    %13 = sbr.rel (0) target = $region9
  $region8: #{a_call__.1} parent=0 // pred_region
    _
  $region9: #{a_call__.1} parent=0 // pred_fallthru
    _
  // Predicated region
  $region10: #{a_call__.1} parent=0 // pred_check
    _
  $region11: #{a_call__.1} parent=0 // pred_check_branch
    %15 = sbr.rel (0) target = $region13
  $region12: #{a_call__.1} parent=0 // pred_region
    _
  $region13: #{a_call__.1} parent=0 // pred_fallthru
    _
  // Predicated region
  $region14: #{a_call__.1} parent=0 // pred_check
    _
  $region15: #{a_call__.1} parent=0 // pred_check_branch
    %17 = sbr.rel (0) target = $region17
  $region16: #{a_call__.1} parent=0 // pred_region
    _
  $region17: #{a_call__.1} parent=0 // pred_fallthru
    _
  // Predicated region
  $region18: #{a_call__.1} parent=0 // pred_check
    _
  $region19: #{a_call__.1} parent=0 // pred_check_branch
    %19 = sbr.rel (0) target = $region21
  $region20: #{a_call__.1} parent=0 // pred_region
    _
  $region21: #{a_call__.1} parent=0 // pred_fallthru
    _
  %v21 = vld [vmem:[%s0] sm:$0xf]
  %v22 = vld [vmem:[%s0 + $0x4] sm:$0xf]
  %v23 = vld [vmem:[%s1] sm:$0xf]
  %v24 = vld [vmem:[%s1 + $0x4] sm:$0xf]
  %v25 = vld [vmem:[%s1 + $0x8] sm:$0xf]
  %v26 = vld [vmem:[%s1 + $0xc] sm:$0xf]
  %v27 = vld [vmem:[%s1 + $0x10] sm:$0xf]
  %v28 = vld [vmem:[%s1 + $0x14] sm:$0xf]
  %v29 = vld [vmem:[%s1 + $0x18] sm:$0xf]
  %v30 = vld [vmem:[%s1 + $0x1c] sm:$0xf]
  %v31 = vld [vmem:[%s1 + $0x20] sm:$0xf]
  %v32 = vld [vmem:[%s1 + $0x24] sm:$0xf]
  %v33 = vld [vmem:[%s1 + $0x28] sm:$0xf]
  %v34 = vld [vmem:[%s1 + $0x2c] sm:$0xf]
  %v35 = vld [vmem:[%s1 + $0x30] sm:$0xf]
  %v36 = vld [vmem:[%s1 + $0x34] sm:$0xf]
  %v37 = vld [vmem:[%s1 + $0x38] sm:$0xf]
  %v38 = vld [vmem:[%s1 + $0x3c] sm:$0xf]
  %v39 = vld [vmem:[%s2] sm:$0x1]
  %v41 = vlaneseq
  %v42 = vshrl.u32 %v41, 7
  %v43 = vsub.s32 0, %v42
  %v44 = vrot.slane %v39, %v43
  %v48 = vunpack.c.l.b16 %v21
  %v49 = vunpack.c.l.b16 %v22
  %v50 = vpack.c.b16 %v49, %v48
  %v68 = vunpack.c.l.b16 %v23
  %v69 = vunpack.c.l.b16 %v24
  %v70 = vunpack.c.l.b16 %v25
  %v71 = vunpack.c.l.b16 %v26
  %v72 = vunpack.c.l.b16 %v27
  %v73 = vunpack.c.l.b16 %v28
  %v74 = vunpack.c.l.b16 %v29
  %v75 = vunpack.c.l.b16 %v30
  %v76 = vunpack.c.l.b16 %v31
  %v77 = vunpack.c.l.b16 %v32
  %v78 = vunpack.c.l.b16 %v33
  %v79 = vunpack.c.l.b16 %v34
  %v80 = vunpack.c.l.b16 %v35
  %v81 = vunpack.c.l.b16 %v36
  %v82 = vunpack.c.l.b16 %v37
  %v83 = vunpack.c.l.b16 %v38
  %v84 = vpack.c.b16 %v69, %v68
  %v85 = vpack.c.b16 %v71, %v70
  %v86 = vpack.c.b16 %v73, %v72
  %v87 = vpack.c.b16 %v75, %v74
  %v88 = vpack.c.b16 %v77, %v76
  %v89 = vpack.c.b16 %v79, %v78
  %v90 = vpack.c.b16 %v81, %v80
  %v91 = vpack.c.b16 %v83, %v82
  %100 = vmatprep.subr.bf16.mxu0 0
  %101 = vmatpush1.bf16.msra.mxu0 %v91
  %102 = vmatprep.subr.bf16.mxu0 0
  %103 = vmatpush1.bf16.msra.mxu0 %v90
  %104 = vmatprep.subr.bf16.mxu0 0
  %105 = vmatpush1.bf16.msra.mxu0 %v89
  %106 = vmatprep.subr.bf16.mxu0 0
  %107 = vmatpush1.bf16.msra.mxu0 %v88
  %108 = vmatprep.subr.bf16.mxu0 0
  %109 = vmatpush1.bf16.msra.mxu0 %v87
  %110 = vmatprep.subr.bf16.mxu0 0
  %111 = vmatpush1.bf16.msra.mxu0 %v86
  %112 = vmatprep.subr.bf16.mxu0 0
  %113 = vmatpush1.bf16.msra.mxu0 %v85
  %114 = vmatprep.subr.bf16.mxu0 0
  %115 = vmatpush1.bf16.msra.mxu0 %v84
  %116 = vmatprep.subr.bf16.mxu0 0
  %117 = vmatpush2.bf16.msra.mxu0 0
  %118 = vmatprep.subr.bf16.mxu0 0
  %119 = vmatpush2.bf16.msra.mxu0 0
  %120 = vmatprep.subr.bf16.mxu0 0
  %121 = vmatpush2.bf16.msra.mxu0 0
  %122 = vmatprep.subr.bf16.mxu0 0
  %123 = vmatpush2.bf16.msra.mxu0 0
  %124 = vmatprep.subr.bf16.mxu0 0
  %125 = vmatpush2.bf16.msra.mxu0 0
  %126 = vmatprep.subr.bf16.mxu0 0
  %127 = vmatpush2.bf16.msra.mxu0 0
  %128 = vmatprep.subr.bf16.mxu0 0
  %129 = vmatpush2.bf16.msra.mxu0 0
  %130 = vmatprep.subr.bf16.mxu0 0
  %131 = vmatpush2.bf16.msra.mxu0 0
  %132 = vmatprep.mubr.bf16.mxu0 0
  %133 = vmatmul.mubr.bf16.gmra.mxu0 %v50
  %v134 = vpop.f32.mrf.mxu0
  %v135 = vadd.f32 %v44, %v134
  %v136 = vpop.f32.mrf.mxu0
  %v137 = vpop.f32.mrf.mxu0
  %v138 = vadd.f32 %v44, %v137
  %v139 = vpop.f32.mrf.mxu0
  %140 = vdwg.mxu0
  %v141 = vsub.f32 0.0, %v135
  %v142 = vsub.f32 0.0, %v138
  %v143 = vmul.f32 %v141, 1.442695
  %v144 = vpow.pop %v143
  %v145 = vmul.f32 %v142, 1.442695
  %v146 = vpow.pop %v145
  %v147 = vadd.f32 %v144, 1.0
  %v148 = vadd.f32 %v146, 1.0
  %v149 = vrcp.pop %v147
  %v150 = vrcp.pop %v148
  %v151 = vpack.c.bf16 %v150, %v149
  %v152 = vld [vmem:[%s3] sm:$0xf]
  %v153 = vld [vmem:[%s3 + $0x4] sm:$0xf]
  %v154 = vld [vmem:[%s3 + $0x8] sm:$0xf]
  %v155 = vld [vmem:[%s3 + $0xc] sm:$0xf]
  %v156 = vld [vmem:[%s3 + $0x10] sm:$0xf]
  %v157 = vld [vmem:[%s3 + $0x14] sm:$0xf]
  %v158 = vld [vmem:[%s3 + $0x18] sm:$0xf]
  %v159 = vld [vmem:[%s3 + $0x1c] sm:$0xf]
  %v160 = vld [vmem:[%s3 + $0x20] sm:$0xf]
  %v161 = vld [vmem:[%s3 + $0x24] sm:$0xf]
  %v162 = vld [vmem:[%s3 + $0x28] sm:$0xf]
  %v163 = vld [vmem:[%s3 + $0x2c] sm:$0xf]
  %v164 = vld [vmem:[%s3 + $0x30] sm:$0xf]
  %v165 = vld [vmem:[%s3 + $0x34] sm:$0xf]
  %v166 = vld [vmem:[%s3 + $0x38] sm:$0xf]
  %v167 = vld [vmem:[%s3 + $0x3c] sm:$0xf]
  %v168 = vld [vmem:[%s4] sm:$0x1]
  %v170 = vlaneseq
  %v171 = vshrl.u32 %v170, 7
  %v172 = vsub.s32 0, %v171
  %v173 = vrot.slane %v168, %v172
  %v191 = vunpack.c.l.b16 %v152
  %v192 = vunpack.c.l.b16 %v153
  %v193 = vunpack.c.l.b16 %v154
  %v194 = vunpack.c.l.b16 %v155
  %v195 = vunpack.c.l.b16 %v156
  %v196 = vunpack.c.l.b16 %v157
  %v197 = vunpack.c.l.b16 %v158
  %v198 = vunpack.c.l.b16 %v159
  %v199 = vunpack.c.l.b16 %v160
  %v200 = vunpack.c.l.b16 %v161
  %v201 = vunpack.c.l.b16 %v162
  %v202 = vunpack.c.l.b16 %v163
  %v203 = vunpack.c.l.b16 %v164
  %v204 = vunpack.c.l.b16 %v165
  %v205 = vunpack.c.l.b16 %v166
  %v206 = vunpack.c.l.b16 %v167
  %v207 = vpack.c.b16 %v192, %v191
  %v208 = vpack.c.b16 %v194, %v193
  %v209 = vpack.c.b16 %v196, %v195
  %v210 = vpack.c.b16 %v198, %v197
  %v211 = vpack.c.b16 %v200, %v199
  %v212 = vpack.c.b16 %v202, %v201
  %v213 = vpack.c.b16 %v204, %v203
  %v214 = vpack.c.b16 %v206, %v205
  %223 = vmatprep.subr.bf16.mxu0 0
  %224 = vmatpush1.bf16.msra.mxu0 %v214
  %225 = vmatprep.subr.bf16.mxu0 0
  %226 = vmatpush1.bf16.msra.mxu0 %v213
  %227 = vmatprep.subr.bf16.mxu0 0
  %228 = vmatpush1.bf16.msra.mxu0 %v212
  %229 = vmatprep.subr.bf16.mxu0 0
  %230 = vmatpush1.bf16.msra.mxu0 %v211
  %231 = vmatprep.subr.bf16.mxu0 0
  %232 = vmatpush1.bf16.msra.mxu0 %v210
  %233 = vmatprep.subr.bf16.mxu0 0
  %234 = vmatpush1.bf16.msra.mxu0 %v209
  %235 = vmatprep.subr.bf16.mxu0 0
  %236 = vmatpush1.bf16.msra.mxu0 %v208
  %237 = vmatprep.subr.bf16.mxu0 0
  %238 = vmatpush1.bf16.msra.mxu0 %v207
  %239 = vmatprep.subr.bf16.mxu0 0
  %240 = vmatpush2.bf16.msra.mxu0 0
  %241 = vmatprep.subr.bf16.mxu0 0
  %242 = vmatpush2.bf16.msra.mxu0 0
  %243 = vmatprep.subr.bf16.mxu0 0
  %244 = vmatpush2.bf16.msra.mxu0 0
  %245 = vmatprep.subr.bf16.mxu0 0
  %246 = vmatpush2.bf16.msra.mxu0 0
  %247 = vmatprep.subr.bf16.mxu0 0
  %248 = vmatpush2.bf16.msra.mxu0 0
  %249 = vmatprep.subr.bf16.mxu0 0
  %250 = vmatpush2.bf16.msra.mxu0 0
  %251 = vmatprep.subr.bf16.mxu0 0
  %252 = vmatpush2.bf16.msra.mxu0 0
  %253 = vmatprep.subr.bf16.mxu0 0
  %254 = vmatpush2.bf16.msra.mxu0 0
  %255 = vmatprep.mubr.bf16.mxu0 0
  %256 = vmatmul.mubr.bf16.gmra.mxu0 %v151
  %v257 = vpop.f32.mrf.mxu0
  %v258 = vadd.f32 %v173, %v257
  %v259 = vpop.f32.mrf.mxu0
  %v260 = vpop.f32.mrf.mxu0
  %v261 = vadd.f32 %v173, %v260
  %v262 = vpop.f32.mrf.mxu0
  %263 = vdwg.mxu0
  %v264 = vpack.c.bf16 %v261, %v258
  %v266 = vunpack.c.l.b16 %v264
  %v267 = vunpack.c.h.b16 %v264
  %v268 = vpack.c.b16 %v266, %v266
  %v269 = vpack.c.b16 %v267, %v267
  %272 = vst [vmem:[%s5] sm:$0xf] %v268
  %273 = vst [vmem:[%s5 + $0x4] sm:$0xf] %v269
  // Predicated region
  $region22: #{a_call__.1} parent=0 // pred_check
    _
  $region23: #{a_call__.1} parent=0 // pred_check_branch
    %275 = sbr.rel (0) target = $region25
  $region24: #{a_call__.1} parent=0 // pred_region
    _
  $region25: #{a_call__.1} parent=0 // pred_fallthru
    _
  // Predicated region
  $region26: #{a_call__.1} parent=0 // pred_check
    _
  $region27: #{a_call__.1} parent=0 // pred_check_branch
    %277 = sbr.rel (0) target = $region29
  $region28: #{a_call__.1} parent=0 // pred_region
    _
  $region29: #{a_call__.1} parent=0 // pred_fallthru
    _

</llo_original>
